<compile_context>
chip_gen: v6e
topology: v6e:2x2x1
jax: 0.10.0
libtpu: 0.0.40
codegen_flags: <defaults>
</compile_context>

<pallas_src>
import jax
import jax.numpy as jnp
from jax.experimental import pallas as pl
from jax.experimental.pallas import tpu as pltpu


LANE = 128
SUBLANE = 8


def _round_up(v, m):
    return ((v + m - 1) // m) * m


# --------------------------------- kernel ------------------------------------
def cls_head_kernel(x_ref, w1_ref, b1_ref, w2_ref, b2_ref, o_ref):
    # dense -> tanh -> out_proj, all on the resident VMEM tile.
    h = jnp.dot(x_ref[...], w1_ref[...], preferred_element_type=jnp.float32) + b1_ref[...]
    h = jnp.tanh(h)
    y = jnp.dot(h, w2_ref[...], preferred_element_type=jnp.float32) + b2_ref[...]
    o_ref[...] = y.astype(o_ref.dtype)


# ------------------------------ pallas wrapper --------------------------------
def make_cls_head_call(n_rows, in_dim, inner_dim, n_out, block_rows):
    grid = (pl.cdiv(n_rows, block_rows),)
    return pl.pallas_call(
        cls_head_kernel,
        out_shape=jax.ShapeDtypeStruct((n_rows, n_out), jnp.float32),
        grid=grid,
        in_specs=[
            pl.BlockSpec((block_rows, in_dim), lambda i: (i, 0)),   # x rows
            pl.BlockSpec((in_dim, inner_dim), lambda i: (0, 0)),    # dense W (in, out)
            pl.BlockSpec((1, inner_dim), lambda i: (0, 0)),         # dense b
            pl.BlockSpec((inner_dim, n_out), lambda i: (0, 0)),     # out_proj W (in, out)
            pl.BlockSpec((1, n_out), lambda i: (0, 0)),             # out_proj b
        ],
        out_specs=pl.BlockSpec((block_rows, n_out), lambda i: (i, 0)),
        compiler_params=pltpu.CompilerParams(
            dimension_semantics=("parallel",),
        ),
    )


def _pick_block_rows(n_rows, in_dim, inner_dim, n_out, max_block_rows, vmem_budget_bytes):
    """Largest row tile (multiple of 8) fitting the VMEM budget with double buffering."""
    if n_rows <= max_block_rows:
        return n_rows
    weight_bytes = 4 * (in_dim * inner_dim + inner_dim + inner_dim * n_out + n_out)
    block_rows = min(max_block_rows, _round_up(n_rows, SUBLANE))
    block_rows = _round_up(block_rows, SUBLANE)
    while block_rows > SUBLANE:
        # x tile + h tile + out tile, x/out double-buffered by the pipeline.
        act_bytes = 4 * block_rows * (2 * in_dim + inner_dim + 2 * n_out)
        if weight_bytes + act_bytes <= vmem_budget_bytes:
            break
        block_rows -= SUBLANE
    return max(block_rows, SUBLANE)


def bart_classification_head(params, x, *, max_block_rows=1024,
                             vmem_budget_bytes=32 * 1024 * 1024):
    """Eval-mode BartClassificationHead.forward.

    x: (..., input_dim) float32
    returns: (..., num_classes) float32
    """
    in_dim, inner_dim = params['dense_w'].shape
    n_classes = params['out_w'].shape[1]

    lead_shape = x.shape[:-1]
    n_rows = 1
    for d in lead_shape:
        n_rows *= d
    x2d = x.reshape(n_rows, in_dim)

    # Zero-pad the class dim to a lane multiple so the output store is unmasked.
    n_out = _round_up(n_classes, LANE)
    out_w = params['out_w']
    out_b = params['out_b']
    if n_out != n_classes:
        pad = n_out - n_classes
        out_w = jnp.pad(out_w, ((0, 0), (0, pad)))
        out_b = jnp.pad(out_b, ((0, 0), (0, pad)))

    block_rows = _pick_block_rows(n_rows, in_dim, inner_dim, n_out,
                                  max_block_rows, vmem_budget_bytes)

    call = make_cls_head_call(n_rows, in_dim, inner_dim, n_out, block_rows)
    out = call(x2d, params['dense_w'], params['dense_b'], out_w, out_b)

    if n_out != n_classes:
        out = out[:, :n_classes]
    return out.reshape(*lead_shape, n_classes)


# ------------------------------- param setup ----------------------------------
def init_params(key, in_dim, inner_dim, n_classes):
    k1, k2, k3, k4 = jax.random.split(key, 4)

    def dense(k, shape):
        return (jax.random.normal(k, shape, jnp.float32) * 0.02).astype(jnp.float32)

    # NOTE: weights stored as (in, out); kernel computes y = x @ W + b, which is the
    # transpose-equivalent of torch nn.Linear's y = x @ W.T + b.
    return dict(
        dense_w=dense(k1, (in_dim, inner_dim)),
        dense_b=dense(k2, (1, inner_dim)),
        out_w=dense(k3, (inner_dim, n_classes)),
        out_b=dense(k4, (1, n_classes)),
    )


def reference_forward(params, x):
    h = jnp.tanh(x @ params['dense_w'] + params['dense_b'][0])
    return h @ params['out_w'] + params['out_b'][0]


# ----------------------------------- main --------------------------------------
if __name__ == "__main__":
    IN_DIM, INNER_DIM, N_CLASSES = 32, 64, 8
    BATCH, SEQ = 2, 8

    key = jax.random.PRNGKey(0)
    pk, xk = jax.random.split(key)

    params = init_params(pk, IN_DIM, INNER_DIM, N_CLASSES)
    x = jax.random.normal(xk, (BATCH, SEQ, IN_DIM), jnp.float32)

    out = bart_classification_head(params, x)
    out = jax.block_until_ready(out)

    assert out.shape == (BATCH, SEQ, N_CLASSES)
    ref = reference_forward(params, x.reshape(-1, IN_DIM)).reshape(BATCH, SEQ, N_CLASSES)
    assert bool(jnp.all(jnp.isfinite(out)))
    assert bool(jnp.allclose(out, ref, atol=1e-5, rtol=1e-5))
    print("KERNEL_OK")
</pallas_src>

<mosaic_0001>
module attributes {stable_mosaic.version = 11 : i64} {
  func.func @cls_head_kernel(%arg0: i32, %arg1: memref<16x32xf32, #tpu.memory_space<vmem>>, %arg2: memref<32x64xf32, #tpu.memory_space<vmem>>, %arg3: memref<1x64xf32, #tpu.memory_space<vmem>>, %arg4: memref<64x128xf32, #tpu.memory_space<vmem>>, %arg5: memref<1x128xf32, #tpu.memory_space<vmem>>, %arg6: memref<16x128xf32, #tpu.memory_space<vmem>>) attributes {dimension_semantics = [#tpu.dimension_semantics<parallel>], iteration_bounds = array<i64: 1>, scalar_prefetch = 0 : i64, scratch_operands = 0 : i64, tpu.core_type = #tpu.core_type<tc>, window_params = [{transform_indices = @transform_0, window_bounds = array<i64: 16, 32>}, {pipeline_mode = #tpu.pipeline_mode<synchronous>, transform_indices = @transform_1, window_bounds = array<i64: 32, 64>}, {pipeline_mode = #tpu.pipeline_mode<synchronous>, transform_indices = @transform_2, window_bounds = array<i64: 1, 64>}, {pipeline_mode = #tpu.pipeline_mode<synchronous>, transform_indices = @transform_3, window_bounds = array<i64: 64, 128>}, {pipeline_mode = #tpu.pipeline_mode<synchronous>, transform_indices = @transform_4, window_bounds = array<i64: 1, 128>}, {transform_indices = @transform_5, window_bounds = array<i64: 16, 128>}]} {
    %c0 = arith.constant 0 : index
    %c0_0 = arith.constant 0 : index
    %0 = vector.load %arg1[%c0, %c0_0] : memref<16x32xf32, #tpu.memory_space<vmem>>, vector<16x32xf32>
    %c0_1 = arith.constant 0 : index
    %c0_2 = arith.constant 0 : index
    %1 = vector.load %arg2[%c0_1, %c0_2] : memref<32x64xf32, #tpu.memory_space<vmem>>, vector<32x64xf32>
    %cst = arith.constant dense<0.000000e+00> : vector<16x64xf32>
    %2 = tpu.matmul %0, %1, %cst {dimension_numbers = #tpu.dot_dimension_numbers<[1], [0], [0], [1], [0, 0, 1, 1], [], []>} : vector<16x32xf32>, vector<32x64xf32>, vector<16x64xf32> -> vector<16x64xf32>
    %c0_3 = arith.constant 0 : index
    %c0_4 = arith.constant 0 : index
    %3 = vector.load %arg3[%c0_3, %c0_4] : memref<1x64xf32, #tpu.memory_space<vmem>>, vector<1x64xf32>
    %4 = vector.broadcast %3 : vector<1x64xf32> to vector<16x64xf32>
    %5 = arith.addf %2, %4 : vector<16x64xf32>
    %6 = math.tanh %5 : vector<16x64xf32>
    %c0_5 = arith.constant 0 : index
    %c0_6 = arith.constant 0 : index
    %7 = vector.load %arg4[%c0_5, %c0_6] : memref<64x128xf32, #tpu.memory_space<vmem>>, vector<64x128xf32>
    %cst_7 = arith.constant dense<0.000000e+00> : vector<16x128xf32>
    %8 = tpu.matmul %6, %7, %cst_7 {dimension_numbers = #tpu.dot_dimension_numbers<[1], [0], [0], [1], [0, 0, 1, 1], [], []>} : vector<16x64xf32>, vector<64x128xf32>, vector<16x128xf32> -> vector<16x128xf32>
    %c0_8 = arith.constant 0 : index
    %c0_9 = arith.constant 0 : index
    %9 = vector.load %arg5[%c0_8, %c0_9] : memref<1x128xf32, #tpu.memory_space<vmem>>, vector<1x128xf32>
    %10 = vector.broadcast %9 : vector<1x128xf32> to vector<16x128xf32>
    %11 = arith.addf %8, %10 : vector<16x128xf32>
    %c0_10 = arith.constant 0 : index
    %c0_11 = arith.constant 0 : index
    %12 = vector.load %arg6[%c0_10, %c0_11] : memref<16x128xf32, #tpu.memory_space<vmem>>, vector<16x128xf32>
    tpu.vector_store %arg6[%c0_10, %c0_11], %11 {strides = array<i32>} : memref<16x128xf32, #tpu.memory_space<vmem>>, vector<16x128xf32>,
    return
  }
  func.func @transform_0(%arg0: i32) -> (i32, i32) {
    %c0_i32 = arith.constant 0 : i32
    %c0_i32_0 = arith.constant 0 : i32
    return %arg0, %c0_i32 : i32, i32
  }
  func.func @transform_1(%arg0: i32) -> (i32, i32) {
    %c0_i32 = arith.constant 0 : i32
    %c0_i32_0 = arith.constant 0 : i32
    %c0_i32_1 = arith.constant 0 : i32
    return %c0_i32, %c0_i32_0 : i32, i32
  }
  func.func @transform_2(%arg0: i32) -> (i32, i32) {
    %c0_i32 = arith.constant 0 : i32
    %c0_i32_0 = arith.constant 0 : i32
    %c0_i32_1 = arith.constant 0 : i32
    return %c0_i32, %c0_i32_0 : i32, i32
  }
  func.func @transform_3(%arg0: i32) -> (i32, i32) {
    %c0_i32 = arith.constant 0 : i32
    %c0_i32_0 = arith.constant 0 : i32
    %c0_i32_1 = arith.constant 0 : i32
    return %c0_i32, %c0_i32_0 : i32, i32
  }
  func.func @transform_4(%arg0: i32) -> (i32, i32) {
    %c0_i32 = arith.constant 0 : i32
    %c0_i32_0 = arith.constant 0 : i32
    %c0_i32_1 = arith.constant 0 : i32
    return %c0_i32, %c0_i32_0 : i32, i32
  }
  func.func @transform_5(%arg0: i32) -> (i32, i32) {
    %c0_i32 = arith.constant 0 : i32
    %c0_i32_0 = arith.constant 0 : i32
    return %arg0, %c0_i32 : i32, i32
  }
}

</mosaic_0001>

<llo_original>
// kernel: tpu_custom_call.1
$region0: #{tpu_custom_call.1}
  #allocation0 [shape = 'u32[]', space=smem, size = 0x4, offset = 0x4, fixed_abs, tag = 'smem constant byte address 0x4 - core index']
  #allocation1 [shape = 'u32[144,128]{1,0:T(1,128)}', space=vmem, size = 0x12000, scoped, tag = 'internal scratch']
  %s0 = inlined_call_operand.hbm [shape: f32[16,32], index: 0, kind: input, shape index: {}]
  %s1 = inlined_call_operand.hbm [shape: f32[32,64], index: 1, kind: input, shape index: {}]
  %s2 = inlined_call_operand.vmem [shape: f32[1,64], index: 2, kind: input, shape index: {}]
  %s3 = inlined_call_operand.hbm [shape: f32[64,128], index: 3, kind: input, shape index: {}]
  %s4 = inlined_call_operand.vmem [shape: f32[1,128], index: 4, kind: input, shape index: {}]
  %s5 = inlined_call_operand.hbm [shape: f32[16,128], index: 5, kind: output, shape index: {}]
  %s6 = sld [smem:[#allocation0]]
  $region42: #{tpu_custom_call.1} parent=0
    _
  %s8 = ssub.s32 1, %s6
  %s9 = scalar_select 0, %s8, %s6
  $region1: #{tpu_custom_call.1} parent=0
    #allocation2 [shape = 'u8[8192]{0}', space=vmem, size = 0x2000, scoped, tag = 'input window, operand 0, single buffered']
    #allocation3 [shape = 's32[1]{0}', space=sflag, size = 0x4, scoped, tag = 'scoped memory for tpu_custom_call.1']
    #allocation4 [shape = 's32[1]{0}', space=sflag, size = 0x4, scoped, tag = 'scoped memory for tpu_custom_call.1']
    #allocation5 [shape = 'u8[16384]{0}', space=vmem, size = 0x4000, scoped, tag = 'input window, operand 1, single buffered']
    #allocation6 [shape = 's32[1]{0}', space=sflag, size = 0x4, scoped, tag = 'scoped memory for tpu_custom_call.1']
    #allocation7 [shape = 'u8[32768]{0}', space=vmem, size = 0x8000, scoped, tag = 'input window, operand 3, single buffered']
    #allocation8 [shape = 'u8[8192]{0}', space=vmem, size = 0x2000, scoped, tag = 'output window, operand 0, single buffered']
    %10 = vsyncpa [#allocation3], 0
    %11 = vsyncpa [#allocation6], 0
    %12 = vsyncpa [#allocation4], 0
    // Predicated region
    $region2: #{tpu_custom_call.1} parent=1 // pred_check
      _
    $region3: #{tpu_custom_call.1} parent=1 // pred_check_branch
      %14 = sbr.rel (0) target = $region5
    $region4: #{tpu_custom_call.1} parent=1 // pred_region
      %s16 = ssub.s32 256, 256
      %17 = vsyncadd [#allocation3], %s16
      %s18 = sshll.u32 [#allocation2], 4
      %s19 = int_to_ptr.vmem [resolvable:$true] %s18
      %24 = dma.hbm_to_vmem [thread:$0]  %s0, 256, %s19, [#allocation3], 128, 128, 8
    $region5: #{tpu_custom_call.1} parent=1 // pred_fallthru
      _
    // Predicated region
    $region6: #{tpu_custom_call.1} parent=1 // pred_check
      _
    $region7: #{tpu_custom_call.1} parent=1 // pred_check_branch
      %26 = sbr.rel (0) target = $region9
    $region8: #{tpu_custom_call.1} parent=1 // pred_region
      %s28 = ssub.s32 512, 512
      %29 = vsyncadd [#allocation6], %s28
      %s30 = sshll.u32 [#allocation5], 4
      %s31 = int_to_ptr.vmem [resolvable:$true] %s30
      %36 = dma.hbm_to_vmem [thread:$0]  %s1, 512, %s31, [#allocation6], 128, 128, 8
    $region9: #{tpu_custom_call.1} parent=1 // pred_fallthru
      _
    // Predicated region
    $region10: #{tpu_custom_call.1} parent=1 // pred_check
      _
    $region11: #{tpu_custom_call.1} parent=1 // pred_check_branch
      %38 = sbr.rel (0) target = $region13
    $region12: #{tpu_custom_call.1} parent=1 // pred_region
      _
    $region13: #{tpu_custom_call.1} parent=1 // pred_fallthru
      _
    // Predicated region
    $region14: #{tpu_custom_call.1} parent=1 // pred_check
      _
    $region15: #{tpu_custom_call.1} parent=1 // pred_check_branch
      %40 = sbr.rel (0) target = $region17
    $region16: #{tpu_custom_call.1} parent=1 // pred_region
      %s42 = ssub.s32 1024, 1024
      %43 = vsyncadd [#allocation6], %s42
      %s44 = sshll.u32 [#allocation7], 4
      %s45 = int_to_ptr.vmem [resolvable:$true] %s44
      %50 = dma.hbm_to_vmem [thread:$0]  %s3, 1024, %s45, [#allocation6], 128, 128, 8
    $region17: #{tpu_custom_call.1} parent=1 // pred_fallthru
      _
    // Predicated region
    $region18: #{tpu_custom_call.1} parent=1 // pred_check
      _
    $region19: #{tpu_custom_call.1} parent=1 // pred_check_branch
      %52 = sbr.rel (0) target = $region21
    $region20: #{tpu_custom_call.1} parent=1 // pred_region
      _
    $region21: #{tpu_custom_call.1} parent=1 // pred_fallthru
      _
    // Predicated region
    $region22: #{tpu_custom_call.1} parent=1 // pred_check
      _
    $region23: #{tpu_custom_call.1} parent=1 // pred_check_branch
      %54 = sbr.rel (0) target = $region25
    $region24: #{tpu_custom_call.1} parent=1 // pred_region
      %55 = dma.done [#allocation3], 256
    $region25: #{tpu_custom_call.1} parent=1 // pred_fallthru
      _
    // Predicated region
    $region26: #{tpu_custom_call.1} parent=1 // pred_check
      _
    $region27: #{tpu_custom_call.1} parent=1 // pred_check_branch
      %57 = sbr.rel (0) target = $region29
    $region28: #{tpu_custom_call.1} parent=1 // pred_region
      %58 = dma.done [#allocation6], 512
    $region29: #{tpu_custom_call.1} parent=1 // pred_fallthru
      _
    // Predicated region
    $region30: #{tpu_custom_call.1} parent=1 // pred_check
      _
    $region31: #{tpu_custom_call.1} parent=1 // pred_check_branch
      %60 = sbr.rel (0) target = $region33
    $region32: #{tpu_custom_call.1} parent=1 // pred_region
      %61 = dma.done [#allocation6], 1024
    $region33: #{tpu_custom_call.1} parent=1 // pred_fallthru
      _
    %v62 = vld [vmem:[#allocation2] sm:$0xff]
    %v63 = vld [vmem:[#allocation2 + $0x8] sm:$0xff]
    %v64 = vld [vmem:[#allocation5] sm:$0xff]
    %v65 = vld [vmem:[#allocation5 + $0x8] sm:$0xff]
    %v66 = vld [vmem:[#allocation5 + $0x10] sm:$0xff]
    %v67 = vld [vmem:[#allocation5 + $0x18] sm:$0xff]
    %v68 = vld [vmem:[%s2] sm:$0x1]
    %v70 = vlaneseq
    %v71 = vshrl.u32 %v70, 7
    %v72 = vsub.s32 0, %v71
    %v73 = vrot.slane %v68, %v72
    %vm75 = vcmask 261120
    %v77 = vsel %vm75, %v62, 0
    %v80 = vsel %vm75, %v63, 0
    %82 = vmatprep.subr.mxu0 0.0
    %83 = vmatpush1.msra.mxu0 0.0
    %84 = vmatprep.subr.mxu0 0.0
    %85 = vmatpush1.msra.mxu0 0.0
    %86 = vmatprep.subr.mxu0 0.0
    %87 = vmatpush1.msra.mxu0 0.0
    %88 = vmatprep.subr.mxu0 0.0
    %89 = vmatpush1.msra.mxu0 0.0
    %90 = vmatprep.subr.mxu0 0.0
    %91 = vmatpush1.msra.mxu0 0.0
    %92 = vmatprep.subr.mxu0 0.0
    %93 = vmatpush1.msra.mxu0 0.0
    %94 = vmatprep.subr.mxu0 0.0
    %95 = vmatpush1.msra.mxu0 0.0
    %96 = vmatprep.subr.mxu0 0.0
    %97 = vmatpush1.msra.mxu0 0.0
    %98 = vmatprep.subr.mxu0 0.0
    %99 = vmatpush1.msra.mxu0 0.0
    %100 = vmatprep.subr.mxu0 0.0
    %101 = vmatpush1.msra.mxu0 0.0
    %102 = vmatprep.subr.mxu0 0.0
    %103 = vmatpush1.msra.mxu0 0.0
    %104 = vmatprep.subr.mxu0 0.0
    %105 = vmatpush1.msra.mxu0 0.0
    %106 = vmatprep.subr.mxu0 0.0
    %107 = vmatpush1.msra.mxu0 %v67
    %108 = vmatprep.subr.mxu0 0.0
    %109 = vmatpush1.msra.mxu0 %v66
    %110 = vmatprep.subr.mxu0 0.0
    %111 = vmatpush1.msra.mxu0 %v65
    %112 = vmatprep.subr.mxu0 0.0
    %113 = vmatpush1.msra.mxu0 %v64
    %114 = vmatprep.subr.mxu0 0.0
    %115 = vmatpush2.msra.mxu0 0.0
    %116 = vmatprep.subr.mxu0 0.0
    %117 = vmatpush2.msra.mxu0 0.0
    %118 = vmatprep.subr.mxu0 0.0
    %119 = vmatpush2.msra.mxu0 0.0
    %120 = vmatprep.subr.mxu0 0.0
    %121 = vmatpush2.msra.mxu0 0.0
    %122 = vmatprep.subr.mxu0 0.0
    %123 = vmatpush2.msra.mxu0 0.0
    %124 = vmatprep.subr.mxu0 0.0
    %125 = vmatpush2.msra.mxu0 0.0
    %126 = vmatprep.subr.mxu0 0.0
    %127 = vmatpush2.msra.mxu0 0.0
    %128 = vmatprep.subr.mxu0 0.0
    %129 = vmatpush2.msra.mxu0 0.0
    %130 = vmatprep.subr.mxu0 0.0
    %131 = vmatpush2.msra.mxu0 0.0
    %132 = vmatprep.subr.mxu0 0.0
    %133 = vmatpush2.msra.mxu0 0.0
    %134 = vmatprep.subr.mxu0 0.0
    %135 = vmatpush2.msra.mxu0 0.0
    %136 = vmatprep.subr.mxu0 0.0
    %137 = vmatpush2.msra.mxu0 0.0
    %138 = vmatprep.subr.mxu0 0.0
    %139 = vmatpush2.msra.mxu0 0.0
    %140 = vmatprep.subr.mxu0 0.0
    %141 = vmatpush2.msra.mxu0 0.0
    %142 = vmatprep.subr.mxu0 0.0
    %143 = vmatpush2.msra.mxu0 0.0
    %144 = vmatprep.subr.mxu0 0.0
    %145 = vmatpush2.msra.mxu0 0.0
    %146 = vmatprep.mubr.f32.mxu0 0.0
    %147 = vmatmul.mubr.f32.gmra.mxu0 %v77
    %v148 = vpop.f32.mrf.mxu0
    %v149 = vadd.f32 %v73, %v148
    %v150 = vpop.f32.mrf.mxu0
    %151 = vmatprep.mubr.f32.mxu0 0.0
    %152 = vmatmul.mubr.f32.gmra.mxu0 %v80
    %v153 = vpop.f32.mrf.mxu0
    %v154 = vadd.f32 %v73, %v153
    %v155 = vpop.f32.mrf.mxu0
    %156 = vdwg.mxu0
    %v157 = vtanh.pop %v149
    %v158 = vtanh.pop %v154
    %v159 = vld [vmem:[#allocation7] sm:$0xff]
    %v160 = vld [vmem:[#allocation7 + $0x8] sm:$0xff]
    %v161 = vld [vmem:[#allocation7 + $0x10] sm:$0xff]
    %v162 = vld [vmem:[#allocation7 + $0x18] sm:$0xff]
    %v163 = vld [vmem:[#allocation7 + $0x20] sm:$0xff]
    %v164 = vld [vmem:[#allocation7 + $0x28] sm:$0xff]
    %v165 = vld [vmem:[#allocation7 + $0x30] sm:$0xff]
    %v166 = vld [vmem:[#allocation7 + $0x38] sm:$0xff]
    %v167 = vld [vmem:[%s4] sm:$0x1]
    %v169 = vlaneseq
    %v170 = vshrl.u32 %v169, 7
    %v171 = vsub.s32 0, %v170
    %v172 = vrot.slane %v167, %v171
    %vm174 = vcmask 523264
    %v176 = vsel %vm174, %v157, 0
    %v179 = vsel %vm174, %v158, 0
    %181 = vmatprep.subr.mxu0 0.0
    %182 = vmatpush1.msra.mxu0 0.0
    %183 = vmatprep.subr.mxu0 0.0
    %184 = vmatpush1.msra.mxu0 0.0
    %185 = vmatprep.subr.mxu0 0.0
    %186 = vmatpush1.msra.mxu0 0.0
    %187 = vmatprep.subr.mxu0 0.0
    %188 = vmatpush1.msra.mxu0 0.0
    %189 = vmatprep.subr.mxu0 0.0
    %190 = vmatpush1.msra.mxu0 0.0
    %191 = vmatprep.subr.mxu0 0.0
    %192 = vmatpush1.msra.mxu0 0.0
    %193 = vmatprep.subr.mxu0 0.0
    %194 = vmatpush1.msra.mxu0 0.0
    %195 = vmatprep.subr.mxu0 0.0
    %196 = vmatpush1.msra.mxu0 0.0
    %197 = vmatprep.subr.mxu0 0.0
    %198 = vmatpush1.msra.mxu0 %v166
    %199 = vmatprep.subr.mxu0 0.0
    %200 = vmatpush1.msra.mxu0 %v165
    %201 = vmatprep.subr.mxu0 0.0
    %202 = vmatpush1.msra.mxu0 %v164
    %203 = vmatprep.subr.mxu0 0.0
    %204 = vmatpush1.msra.mxu0 %v163
    %205 = vmatprep.subr.mxu0 0.0
    %206 = vmatpush1.msra.mxu0 %v162
    %207 = vmatprep.subr.mxu0 0.0
    %208 = vmatpush1.msra.mxu0 %v161
    %209 = vmatprep.subr.mxu0 0.0
    %210 = vmatpush1.msra.mxu0 %v160
    %211 = vmatprep.subr.mxu0 0.0
    %212 = vmatpush1.msra.mxu0 %v159
    %213 = vmatprep.subr.mxu0 0.0
    %214 = vmatpush2.msra.mxu0 0.0
    %215 = vmatprep.subr.mxu0 0.0
    %216 = vmatpush2.msra.mxu0 0.0
    %217 = vmatprep.subr.mxu0 0.0
    %218 = vmatpush2.msra.mxu0 0.0
    %219 = vmatprep.subr.mxu0 0.0
    %220 = vmatpush2.msra.mxu0 0.0
    %221 = vmatprep.subr.mxu0 0.0
    %222 = vmatpush2.msra.mxu0 0.0
    %223 = vmatprep.subr.mxu0 0.0
    %224 = vmatpush2.msra.mxu0 0.0
    %225 = vmatprep.subr.mxu0 0.0
    %226 = vmatpush2.msra.mxu0 0.0
    %227 = vmatprep.subr.mxu0 0.0
    %228 = vmatpush2.msra.mxu0 0.0
    %229 = vmatprep.subr.mxu0 0.0
    %230 = vmatpush2.msra.mxu0 0.0
    %231 = vmatprep.subr.mxu0 0.0
    %232 = vmatpush2.msra.mxu0 0.0
    %233 = vmatprep.subr.mxu0 0.0
    %234 = vmatpush2.msra.mxu0 0.0
    %235 = vmatprep.subr.mxu0 0.0
    %236 = vmatpush2.msra.mxu0 0.0
    %237 = vmatprep.subr.mxu0 0.0
    %238 = vmatpush2.msra.mxu0 0.0
    %239 = vmatprep.subr.mxu0 0.0
    %240 = vmatpush2.msra.mxu0 0.0
    %241 = vmatprep.subr.mxu0 0.0
    %242 = vmatpush2.msra.mxu0 0.0
    %243 = vmatprep.subr.mxu0 0.0
    %244 = vmatpush2.msra.mxu0 0.0
    %245 = vmatprep.mubr.f32.mxu0 0.0
    %246 = vmatmul.mubr.f32.gmra.mxu0 %v176
    %v247 = vpop.f32.mrf.mxu0
    %v248 = vadd.f32 %v172, %v247
    %v249 = vpop.f32.mrf.mxu0
    %250 = vmatprep.mubr.f32.mxu0 0.0
    %251 = vmatmul.mubr.f32.gmra.mxu0 %v179
    %v252 = vpop.f32.mrf.mxu0
    %v253 = vadd.f32 %v172, %v252
    %v254 = vpop.f32.mrf.mxu0
    %255 = vdwg.mxu0
    %256 = vst [vmem:[#allocation8] sm:$0xff] %v248
    %257 = vst [vmem:[#allocation8 + $0x8] sm:$0xff] %v253
    // Predicated region
    $region34: #{tpu_custom_call.1} parent=1 // pred_check
      _
    $region35: #{tpu_custom_call.1} parent=1 // pred_check_branch
      %259 = sbr.rel (0) target = $region37
    $region36: #{tpu_custom_call.1} parent=1 // pred_region
      %s261 = ssub.s32 256, 256
      %262 = vsyncadd [#allocation4], %s261
      %s263 = sshll.u32 [#allocation8], 4
      %s264 = int_to_ptr.vmem [resolvable:$true] %s263
      %269 = dma.vmem_to_hbm [thread:$0]  %s264, 256, %s5, [#allocation4], 128, 128, 8
    $region37: #{tpu_custom_call.1} parent=1 // pred_fallthru
      _
    // Predicated region
    $region38: #{tpu_custom_call.1} parent=1 // pred_check
      _
    $region39: #{tpu_custom_call.1} parent=1 // pred_check_branch
      %271 = sbr.rel (0) target = $region41
    $region40: #{tpu_custom_call.1} parent=1 // pred_region
      %272 = dma.done [#allocation4], 256
    $region41: #{tpu_custom_call.1} parent=1 // pred_fallthru
      _
    %273 = vsyncpa [#allocation3], 1
    %274 = vsyncpa [#allocation6], 1
    %275 = vsyncpa [#allocation4], 1

</llo_original>
